<compile_context>
chip_gen: v7x
topology: tpu7x:2x2x1
jax: 0.10.0
libtpu: 0.0.40
codegen_flags: <defaults>
</compile_context>

<pallas_src>
import functools

import jax
import jax.numpy as jnp
import numpy as np
from jax.experimental import pallas as pl
from jax.experimental.pallas import tpu as pltpu


# Haar synthesis filters, same values / order as the PyTorch module: LL, LH, HL, HH.
_FILTERS = np.array(
    [
        [[0.5, 0.5], [0.5, 0.5]],      # LL
        [[-0.5, 0.5], [-0.5, 0.5]],    # LH
        [[-0.5, -0.5], [0.5, 0.5]],    # HL
        [[0.5, -0.5], [-0.5, 0.5]],    # HH
    ],
    dtype=np.float32,
)


def _build_expand_mats(w: int) -> np.ndarray:
    """(4, W, 4W) matrices E_s with E_s[j, a*2W + 2j + b] = k_s[a, b].

    For coeff flattened to (D*H, W):
        (coeff @ E_s)[d*H + i, a*2W + 2j + b] = coeff[d, i, j] * k_s[a, b]
    which is exactly out_s[d, 2i+a, 2j+b] laid out row-major as (D*H, 4W).
    """
    e = np.zeros((4, w, 4 * w), dtype=np.float32)
    j = np.arange(w)
    for s in range(4):
        for a in range(2):
            for b in range(2):
                e[s, j, a * 2 * w + 2 * j + b] = _FILTERS[s, a, b]
    return e


def _harr_iwav_cat_kernel(xll_ref, x_ref, e_ref, y_ref, out_ref, *, dh):
    # xll_ref : (1, D*H, W)
    # x_ref   : (1, Cx, D*H, W)       channels 1/2/3 = LH/HL/HH coefficients
    # e_ref   : (4, W, 4W)            combined row+col expansion matrices
    # y_ref   : (1, Cy*H, 4W)
    # out_ref : (1, (4D+Cy)*H, 4W)
    for s in range(4):
        coeff = xll_ref[0] if s == 0 else x_ref[0, s]                      # (D*H, W)
        res = jnp.dot(coeff, e_ref[s], preferred_element_type=jnp.float32)  # (D*H, 4W)
        out_ref[0, s * dh:(s + 1) * dh, :] = res.astype(out_ref.dtype)
    # Concat: copy y into the trailing channel slab.
    out_ref[0, 4 * dh:, :] = y_ref[0].astype(out_ref.dtype)


@jax.jit
def harr_iwav_cat(x_LL, x, y):
    B, D, H, W = x_LL.shape
    Cx = x.shape[1]
    assert Cx >= 4 and x.shape == (B, Cx, D, H, W)
    H2, W2 = 2 * H, 2 * W
    Cy = y.shape[1]
    assert y.shape == (B, Cy, H2, W2)
    Cout = 4 * D + Cy
    dh = D * H
    rows_out = Cout * H

    out_dtype = jnp.result_type(x_LL.dtype, x.dtype, y.dtype)
    coeff_dtype = jnp.result_type(x_LL.dtype, x.dtype)

    # Bitcast-level reshapes (row-major linear order preserved; no HBM copies):
    #   x_LL (B,D,H,W)     -> (B, D*H, W)
    #   x    (B,Cx,D,H,W)  -> (B, Cx, D*H, W)
    #   y    (B,Cy,2H,2W)  -> (B, Cy*H, 4W)    (row c*H+i holds output rows 2i,2i+1 of channel c)
    xll_f = x_LL.reshape(B, dh, W)
    x_f = x.reshape(B, Cx, dh, W)
    y_f = y.reshape(B, Cy * H, 4 * W)
    e_mats = jnp.asarray(_build_expand_mats(W), dtype=coeff_dtype)

    # Rough per-step VMEM footprint (double-buffered blocks) -> raise scoped limit when needed.
    def _isz(dt):
        return np.dtype(dt).itemsize

    block_bytes = (
        dh * W * _isz(x_LL.dtype)
        + Cx * dh * W * _isz(x.dtype)
        + Cy * H * 4 * W * _isz(y.dtype)
        + rows_out * 4 * W * _isz(out_dtype)
    )
    const_bytes = 4 * W * 4 * W * _isz(coeff_dtype)
    # Cap at 64 MiB so the request stays within physical VMEM on every generation (incl. v7x).
    vmem_limit = int(min(max(2 * block_bytes + 2 * const_bytes + (4 << 20), 32 << 20), 64 << 20))

    kernel = functools.partial(_harr_iwav_cat_kernel, dh=dh)

    out_flat = pl.pallas_call(
        kernel,
        out_shape=jax.ShapeDtypeStruct((B, rows_out, 4 * W), out_dtype),
        grid_spec=pltpu.PrefetchScalarGridSpec(
            num_scalar_prefetch=0,
            grid=(B,),
            in_specs=[
                pl.BlockSpec((1, dh, W), lambda b: (b, 0, 0)),
                pl.BlockSpec((1, Cx, dh, W), lambda b: (b, 0, 0, 0)),
                pl.BlockSpec((4, W, 4 * W), lambda b: (0, 0, 0)),
                pl.BlockSpec((1, Cy * H, 4 * W), lambda b: (b, 0, 0)),
            ],
            out_specs=pl.BlockSpec((1, rows_out, 4 * W), lambda b: (b, 0, 0)),
        ),
        compiler_params=pltpu.CompilerParams(
            dimension_semantics=("parallel",),
            vmem_limit_bytes=vmem_limit,
        ),
    )(xll_f, x_f, e_mats, y_f)

    # Free reshape back to the module's NCHW-style output layout.
    return out_flat.reshape(B, Cout, H2, W2)


def _reference(x_LL, x, y):
    """Pure-JAX reference of the PyTorch forward pass."""
    filt = jnp.asarray(_FILTERS)

    def up(band, k):
        b, d, h, w = band.shape
        t = band[:, :, :, None, :, None] * k[None, None, None, :, None, :]
        return t.reshape(b, d, 2 * h, 2 * w)

    LL = up(x_LL, filt[0])
    LH = up(x[:, 1], filt[1])
    HL = up(x[:, 2], filt[2])
    HH = up(x[:, 3], filt[3])
    return jnp.concatenate([LL, LH, HL, HH, y], axis=1)


if __name__ == "__main__":
    key = jax.random.PRNGKey(0)
    k1, k2, k3 = jax.random.split(key, 3)

    B, D, H, W, Cy = 2, 4, 8, 8, 4
    x_LL = jax.random.normal(k1, (B, D, H, W), dtype=jnp.float32)
    x = jax.random.normal(k2, (B, 4, D, H, W), dtype=jnp.float32)
    y = jax.random.normal(k3, (B, Cy, 2 * H, 2 * W), dtype=jnp.float32)

    out = harr_iwav_cat(x_LL, x, y)
    out = jax.block_until_ready(out)

    ref = _reference(x_LL, x, y)
    np.testing.assert_allclose(np.asarray(out), np.asarray(ref), rtol=1e-5, atol=1e-5)
    assert out.shape == (B, 4 * D + Cy, 2 * H, 2 * W)
    assert out.dtype == x_LL.dtype

    print("KERNEL_OK")
</pallas_src>

<mosaic_0001>
module attributes {stable_mosaic.version = 11 : i64} {
  func.func @_harr_iwav_cat_kernel(%arg0: i32, %arg1: memref<1x32x8xf32, #tpu.memory_space<vmem>>, %arg2: memref<1x4x32x8xf32, #tpu.memory_space<vmem>>, %arg3: memref<4x8x32xf32, #tpu.memory_space<vmem>>, %arg4: memref<1x32x32xf32, #tpu.memory_space<vmem>>, %arg5: memref<1x160x32xf32, #tpu.memory_space<vmem>>) attributes {dimension_semantics = [#tpu.dimension_semantics<parallel>], iteration_bounds = array<i64: 2>, scalar_prefetch = 0 : i64, scratch_operands = 0 : i64, tpu.core_type = #tpu.core_type<tc>, window_params = [{transform_indices = @transform_0, window_bounds = array<i64: 1, 32, 8>}, {transform_indices = @transform_1, window_bounds = array<i64: 1, 4, 32, 8>}, {pipeline_mode = #tpu.pipeline_mode<synchronous>, transform_indices = @transform_2, window_bounds = array<i64: 4, 8, 32>}, {transform_indices = @transform_3, window_bounds = array<i64: 1, 32, 32>}, {transform_indices = @transform_4, window_bounds = array<i64: 1, 160, 32>}]} {
    %c0 = arith.constant 0 : index
    %c0_0 = arith.constant 0 : index
    %c0_1 = arith.constant 0 : index
    %0 = vector.load %arg1[%c0, %c0_0, %c0_1] : memref<1x32x8xf32, #tpu.memory_space<vmem>>, vector<1x32x8xf32>
    %1 = vector.shape_cast %0 : vector<1x32x8xf32> to vector<32x8xf32>
    %c0_2 = arith.constant 0 : index
    %c0_3 = arith.constant 0 : index
    %c0_4 = arith.constant 0 : index
    %2 = vector.load %arg3[%c0_2, %c0_3, %c0_4] : memref<4x8x32xf32, #tpu.memory_space<vmem>>, vector<1x8x32xf32>
    %3 = vector.shape_cast %2 : vector<1x8x32xf32> to vector<8x32xf32>
    %cst = arith.constant dense<0.000000e+00> : vector<32x32xf32>
    %4 = tpu.matmul %1, %3, %cst {dimension_numbers = #tpu.dot_dimension_numbers<[1], [0], [0], [1], [0, 0, 1, 1], [], []>} : vector<32x8xf32>, vector<8x32xf32>, vector<32x32xf32> -> vector<32x32xf32>
    %c0_5 = arith.constant 0 : index
    %c0_6 = arith.constant 0 : index
    %c0_7 = arith.constant 0 : index
    %5 = vector.load %arg5[%c0_5, %c0_6, %c0_7] : memref<1x160x32xf32, #tpu.memory_space<vmem>>, vector<1x32x32xf32>
    %6 = vector.shape_cast %5 : vector<1x32x32xf32> to vector<32x32xf32>
    %7 = vector.shape_cast %4 : vector<32x32xf32> to vector<1x32x32xf32>
    tpu.vector_store %arg5[%c0_5, %c0_6, %c0_7], %7 {strides = array<i32>} : memref<1x160x32xf32, #tpu.memory_space<vmem>>, vector<1x32x32xf32>,
    %c0_8 = arith.constant 0 : index
    %c1 = arith.constant 1 : index
    %c0_9 = arith.constant 0 : index
    %c0_10 = arith.constant 0 : index
    %8 = vector.load %arg2[%c0_8, %c1, %c0_9, %c0_10] : memref<1x4x32x8xf32, #tpu.memory_space<vmem>>, vector<1x1x32x8xf32>
    %9 = vector.shape_cast %8 : vector<1x1x32x8xf32> to vector<32x8xf32>
    %c1_11 = arith.constant 1 : index
    %c0_12 = arith.constant 0 : index
    %c0_13 = arith.constant 0 : index
    %10 = vector.load %arg3[%c1_11, %c0_12, %c0_13] : memref<4x8x32xf32, #tpu.memory_space<vmem>>, vector<1x8x32xf32>
    %11 = vector.shape_cast %10 : vector<1x8x32xf32> to vector<8x32xf32>
    %cst_14 = arith.constant dense<0.000000e+00> : vector<32x32xf32>
    %12 = tpu.matmul %9, %11, %cst_14 {dimension_numbers = #tpu.dot_dimension_numbers<[1], [0], [0], [1], [0, 0, 1, 1], [], []>} : vector<32x8xf32>, vector<8x32xf32>, vector<32x32xf32> -> vector<32x32xf32>
    %c0_15 = arith.constant 0 : index
    %c32 = arith.constant 32 : index
    %c0_16 = arith.constant 0 : index
    %13 = vector.load %arg5[%c0_15, %c32, %c0_16] : memref<1x160x32xf32, #tpu.memory_space<vmem>>, vector<1x32x32xf32>
    %14 = vector.shape_cast %13 : vector<1x32x32xf32> to vector<32x32xf32>
    %15 = vector.shape_cast %12 : vector<32x32xf32> to vector<1x32x32xf32>
    tpu.vector_store %arg5[%c0_15, %c32, %c0_16], %15 {strides = array<i32>} : memref<1x160x32xf32, #tpu.memory_space<vmem>>, vector<1x32x32xf32>,
    %c0_17 = arith.constant 0 : index
    %c2 = arith.constant 2 : index
    %c0_18 = arith.constant 0 : index
    %c0_19 = arith.constant 0 : index
    %16 = vector.load %arg2[%c0_17, %c2, %c0_18, %c0_19] : memref<1x4x32x8xf32, #tpu.memory_space<vmem>>, vector<1x1x32x8xf32>
    %17 = vector.shape_cast %16 : vector<1x1x32x8xf32> to vector<32x8xf32>
    %c2_20 = arith.constant 2 : index
    %c0_21 = arith.constant 0 : index
    %c0_22 = arith.constant 0 : index
    %18 = vector.load %arg3[%c2_20, %c0_21, %c0_22] : memref<4x8x32xf32, #tpu.memory_space<vmem>>, vector<1x8x32xf32>
    %19 = vector.shape_cast %18 : vector<1x8x32xf32> to vector<8x32xf32>
    %cst_23 = arith.constant dense<0.000000e+00> : vector<32x32xf32>
    %20 = tpu.matmul %17, %19, %cst_23 {dimension_numbers = #tpu.dot_dimension_numbers<[1], [0], [0], [1], [0, 0, 1, 1], [], []>} : vector<32x8xf32>, vector<8x32xf32>, vector<32x32xf32> -> vector<32x32xf32>
    %c0_24 = arith.constant 0 : index
    %c64 = arith.constant 64 : index
    %c0_25 = arith.constant 0 : index
    %21 = vector.load %arg5[%c0_24, %c64, %c0_25] : memref<1x160x32xf32, #tpu.memory_space<vmem>>, vector<1x32x32xf32>
    %22 = vector.shape_cast %21 : vector<1x32x32xf32> to vector<32x32xf32>
    %23 = vector.shape_cast %20 : vector<32x32xf32> to vector<1x32x32xf32>
    tpu.vector_store %arg5[%c0_24, %c64, %c0_25], %23 {strides = array<i32>} : memref<1x160x32xf32, #tpu.memory_space<vmem>>, vector<1x32x32xf32>,
    %c0_26 = arith.constant 0 : index
    %c3 = arith.constant 3 : index
    %c0_27 = arith.constant 0 : index
    %c0_28 = arith.constant 0 : index
    %24 = vector.load %arg2[%c0_26, %c3, %c0_27, %c0_28] : memref<1x4x32x8xf32, #tpu.memory_space<vmem>>, vector<1x1x32x8xf32>
    %25 = vector.shape_cast %24 : vector<1x1x32x8xf32> to vector<32x8xf32>
    %c3_29 = arith.constant 3 : index
    %c0_30 = arith.constant 0 : index
    %c0_31 = arith.constant 0 : index
    %26 = vector.load %arg3[%c3_29, %c0_30, %c0_31] : memref<4x8x32xf32, #tpu.memory_space<vmem>>, vector<1x8x32xf32>
    %27 = vector.shape_cast %26 : vector<1x8x32xf32> to vector<8x32xf32>
    %cst_32 = arith.constant dense<0.000000e+00> : vector<32x32xf32>
    %28 = tpu.matmul %25, %27, %cst_32 {dimension_numbers = #tpu.dot_dimension_numbers<[1], [0], [0], [1], [0, 0, 1, 1], [], []>} : vector<32x8xf32>, vector<8x32xf32>, vector<32x32xf32> -> vector<32x32xf32>
    %c0_33 = arith.constant 0 : index
    %c96 = arith.constant 96 : index
    %c0_34 = arith.constant 0 : index
    %29 = vector.load %arg5[%c0_33, %c96, %c0_34] : memref<1x160x32xf32, #tpu.memory_space<vmem>>, vector<1x32x32xf32>
    %30 = vector.shape_cast %29 : vector<1x32x32xf32> to vector<32x32xf32>
    %31 = vector.shape_cast %28 : vector<32x32xf32> to vector<1x32x32xf32>
    tpu.vector_store %arg5[%c0_33, %c96, %c0_34], %31 {strides = array<i32>} : memref<1x160x32xf32, #tpu.memory_space<vmem>>, vector<1x32x32xf32>,
    %c0_35 = arith.constant 0 : index
    %c0_36 = arith.constant 0 : index
    %c0_37 = arith.constant 0 : index
    %32 = vector.load %arg4[%c0_35, %c0_36, %c0_37] : memref<1x32x32xf32, #tpu.memory_space<vmem>>, vector<1x32x32xf32>
    %33 = vector.shape_cast %32 : vector<1x32x32xf32> to vector<32x32xf32>
    %c0_38 = arith.constant 0 : index
    %c128 = arith.constant 128 : index
    %c0_39 = arith.constant 0 : index
    %34 = vector.load %arg5[%c0_38, %c128, %c0_39] : memref<1x160x32xf32, #tpu.memory_space<vmem>>, vector<1x32x32xf32>
    %35 = vector.shape_cast %34 : vector<1x32x32xf32> to vector<32x32xf32>
    %36 = vector.shape_cast %33 : vector<32x32xf32> to vector<1x32x32xf32>
    tpu.vector_store %arg5[%c0_38, %c128, %c0_39], %36 {strides = array<i32>} : memref<1x160x32xf32, #tpu.memory_space<vmem>>, vector<1x32x32xf32>,
    return
  }
  func.func @transform_0(%arg0: i32) -> (i32, i32, i32) {
    %c0_i32 = arith.constant 0 : i32
    %c0_i32_0 = arith.constant 0 : i32
    %c0_i32_1 = arith.constant 0 : i32
    return %arg0, %c0_i32, %c0_i32_0 : i32, i32, i32
  }
  func.func @transform_1(%arg0: i32) -> (i32, i32, i32, i32) {
    %c0_i32 = arith.constant 0 : i32
    %c0_i32_0 = arith.constant 0 : i32
    %c0_i32_1 = arith.constant 0 : i32
    %c0_i32_2 = arith.constant 0 : i32
    return %arg0, %c0_i32, %c0_i32_0, %c0_i32_1 : i32, i32, i32, i32
  }
  func.func @transform_2(%arg0: i32) -> (i32, i32, i32) {
    %c0_i32 = arith.constant 0 : i32
    %c0_i32_0 = arith.constant 0 : i32
    %c0_i32_1 = arith.constant 0 : i32
    %c0_i32_2 = arith.constant 0 : i32
    return %c0_i32, %c0_i32_0, %c0_i32_1 : i32, i32, i32
  }
  func.func @transform_3(%arg0: i32) -> (i32, i32, i32) {
    %c0_i32 = arith.constant 0 : i32
    %c0_i32_0 = arith.constant 0 : i32
    %c0_i32_1 = arith.constant 0 : i32
    return %arg0, %c0_i32, %c0_i32_0 : i32, i32, i32
  }
  func.func @transform_4(%arg0: i32) -> (i32, i32, i32) {
    %c0_i32 = arith.constant 0 : i32
    %c0_i32_0 = arith.constant 0 : i32
    %c0_i32_1 = arith.constant 0 : i32
    return %arg0, %c0_i32, %c0_i32_0 : i32, i32, i32
  }
}

</mosaic_0001>

<llo_original>
// kernel: harr_iwav_cat.1
$region0: #{harr_iwav_cat.1}
  #allocation0 [shape = 'u32[]', space=smem, size = 0x4, offset = 0x4, fixed_abs, tag = 'smem constant byte address 0x4 - core index']
  #allocation1 [shape = 'u32[144,128]{1,0:T(1,128)}', space=vmem, size = 0x12000, scoped, tag = 'internal scratch']
  %s0 = inlined_call_operand.vmem [shape: f32[2,32,8], index: 0, kind: input, shape index: {}]
  %s1 = inlined_call_operand.hbm [shape: f32[2,4,32,8], index: 1, kind: input, shape index: {}]
  %s2 = inlined_call_operand.vmem [shape: f32[4,8,32], index: 2, kind: input, shape index: {}]
  %s3 = inlined_call_operand.vmem [shape: f32[2,32,32], index: 3, kind: input, shape index: {}]
  %s4 = inlined_call_operand.vmem [shape: f32[2,160,32], index: 4, kind: output, shape index: {}]
  %s5 = sld [smem:[#allocation0]]
  $region53: #{harr_iwav_cat.1} parent=0
    _
  %s7 = ssub.s32 1, %s5
  %s8 = scalar_select 0, %s7, %s5
  $region1: #{harr_iwav_cat.1} parent=0
    #allocation2 [shape = 'u8[131072]{0}', space=vmem, size = 0x20000, scoped, tag = 'input window, operand 1']
    #allocation3 [shape = 's32[2]{0}', space=sflag, size = 0x8, scoped, tag = 'scoped memory for harr_iwav_cat.1']
    %9 = vsyncpa [#allocation3], 0
    %s10 = scalar_lea.sflag [#allocation3], 1
    %11 = vsyncpa %s10, 0
    loop: start=0, step=1, limit=4
    $region2: #{harr_iwav_cat.1} parent=1 // loop_pre_header
      _
    $region3: #{harr_iwav_cat.1} parent=1 // loop_header
      %s13 = sphi 0, %s17
      %p14 = scmp.ge.s32.totalorder %s13, 4
      %s23 = sphi 0, %s25
      %s26 = sphi 0, %s23
      %s27 = sphi 0, %s26
      %s43 = sphi 0, %s27
      %s49 = sphi 0, %s51
      %s52 = sphi 0, %s49
      %s53 = sphi 0, %s52
      %s69 = sphi 0, %s53
      %s73 = sphi 0, %s73
      %s75 = sphi 0, %s73
      %s76 = sphi 0, %s75
      %s90 = sphi 0, %s76
      %s96 = sphi 0, %s98
      %s99 = sphi 0, %s96
      %s100 = sphi 0, %s99
      %s116 = sphi 0, %s100
      %s122 = sphi 0, %s124
      %s125 = sphi 0, %s122
      %s126 = sphi 0, %s125
      %s142 = sphi 0, %s126
    $region4: #{harr_iwav_cat.1} parent=1 // loop_header_branch
      %16 = sbr.rel (%p14) target = $region8
    $region5: #{harr_iwav_cat.1} parent=1 // loop_body
      %s18 = ssub.s32 %s13, 1
      %s19 = ssub.s32 %s13, 2
      %s20 = sadd.s32 %s13, 1
      %s21 = ssub.s32 %s13, %s20
      %p22 = scmp.eq.s32.totalorder %s21, 0
      %s24 = sadd.s32 %s23, 1
      %s25 = scalar_select %p22, %s23, %s24
      %p28 = pneg %p22
      %p29 = scmp.eq.s32.totalorder %s13, 1
      %p30 = por %p28, %p29
      %p31 = scmp.ne.s32.totalorder %s23, %s26
      %p32 = scmp.eq.s32.totalorder %s13, 0
      %p33 = por %p31, %p32
      %p34 = scmp.ne.s32.totalorder %s23, %s26
      %p35 = scmp.eq.s32.totalorder %s18, 1
      %p36 = por %p34, %p35
      %p37 = scmp.ne.s32.totalorder %s26, %s27
      %p38 = scmp.eq.s32.totalorder %s18, 0
      %p39 = por %p37, %p38
      %p40 = scmp.ne.s32.totalorder %s26, %s27
      %p41 = scmp.eq.s32.totalorder %s19, 1
      %p42 = por %p40, %p41
      %p44 = scmp.ne.s32.totalorder %s27, %s43
      %p45 = scmp.eq.s32.totalorder %s19, 0
      %p46 = por %p44, %p45
      %s47 = ssub.s32 %s13, %s20
      %p48 = scmp.eq.s32.totalorder %s47, 0
      %s50 = sadd.s32 %s49, 1
      %s51 = scalar_select %p48, %s49, %s50
      %p54 = pneg %p48
      %p55 = scmp.eq.s32.totalorder %s13, 1
      %p56 = por %p54, %p55
      %p57 = scmp.ne.s32.totalorder %s49, %s52
      %p58 = scmp.eq.s32.totalorder %s13, 0
      %p59 = por %p57, %p58
      %p60 = scmp.ne.s32.totalorder %s49, %s52
      %p61 = scmp.eq.s32.totalorder %s18, 1
      %p62 = por %p60, %p61
      %p63 = scmp.ne.s32.totalorder %s52, %s53
      %p64 = scmp.eq.s32.totalorder %s18, 0
      %p65 = por %p63, %p64
      %p66 = scmp.ne.s32.totalorder %s52, %s53
      %p67 = scmp.eq.s32.totalorder %s19, 1
      %p68 = por %p66, %p67
      %p70 = scmp.ne.s32.totalorder %s53, %s69
      %p71 = scmp.eq.s32.totalorder %s19, 0
      %p72 = por %p70, %p71
      %s74 = sadd.s32 %s73, 1
      %p77 = scmp.eq.s32.totalorder %s13, 1
      %p78 = scmp.ne.s32.totalorder %s73, %s75
      %p79 = scmp.eq.s32.totalorder %s13, 0
      %p80 = por %p78, %p79
      %p81 = scmp.ne.s32.totalorder %s73, %s75
      %p82 = scmp.eq.s32.totalorder %s18, 1
      %p83 = por %p81, %p82
      %p84 = scmp.ne.s32.totalorder %s75, %s76
      %p85 = scmp.eq.s32.totalorder %s18, 0
      %p86 = por %p84, %p85
      %p87 = scmp.ne.s32.totalorder %s75, %s76
      %p88 = scmp.eq.s32.totalorder %s19, 1
      %p89 = por %p87, %p88
      %p91 = scmp.ne.s32.totalorder %s76, %s90
      %p92 = scmp.eq.s32.totalorder %s19, 0
      %p93 = por %p91, %p92
      %s94 = ssub.s32 %s13, %s20
      %p95 = scmp.eq.s32.totalorder %s94, 0
      %s97 = sadd.s32 %s96, 1
      %s98 = scalar_select %p95, %s96, %s97
      %p101 = pneg %p95
      %p102 = scmp.eq.s32.totalorder %s13, 1
      %p103 = por %p101, %p102
      %p104 = scmp.ne.s32.totalorder %s96, %s99
      %p105 = scmp.eq.s32.totalorder %s13, 0
      %p106 = por %p104, %p105
      %p107 = scmp.ne.s32.totalorder %s96, %s99
      %p108 = scmp.eq.s32.totalorder %s18, 1
      %p109 = por %p107, %p108
      %p110 = scmp.ne.s32.totalorder %s99, %s100
      %p111 = scmp.eq.s32.totalorder %s18, 0
      %p112 = por %p110, %p111
      %p113 = scmp.ne.s32.totalorder %s99, %s100
      %p114 = scmp.eq.s32.totalorder %s19, 1
      %p115 = por %p113, %p114
      %p117 = scmp.ne.s32.totalorder %s100, %s116
      %p118 = scmp.eq.s32.totalorder %s19, 0
      %p119 = por %p117, %p118
      %s120 = ssub.s32 %s13, %s20
      %p121 = scmp.eq.s32.totalorder %s120, 0
      %s123 = sadd.s32 %s122, 1
      %s124 = scalar_select %p121, %s122, %s123
      %p127 = pneg %p121
      %p128 = scmp.eq.s32.totalorder %s13, 1
      %p129 = por %p127, %p128
      %p130 = scmp.ne.s32.totalorder %s122, %s125
      %p131 = scmp.eq.s32.totalorder %s13, 0
      %p132 = por %p130, %p131
      %p133 = scmp.ne.s32.totalorder %s122, %s125
      %p134 = scmp.eq.s32.totalorder %s18, 1
      %p135 = por %p133, %p134
      %p136 = scmp.ne.s32.totalorder %s125, %s126
      %p137 = scmp.eq.s32.totalorder %s18, 0
      %p138 = por %p136, %p137
      %p139 = scmp.ne.s32.totalorder %s125, %s126
      %p140 = scmp.eq.s32.totalorder %s19, 1
      %p141 = por %p139, %p140
      %p143 = scmp.ne.s32.totalorder %s126, %s142
      %p144 = scmp.eq.s32.totalorder %s19, 0
      %p145 = por %p143, %p144
      %p146 = scmp.le.s32.totalorder 1, %s13
      %p147 = scmp.lt.s32.totalorder %s13, 3
      %p148 = pnand %p146, %p147
      %p149 = pneg %p148
      // Predicated region
      $region9: #{harr_iwav_cat.1} parent=5 // pred_check
        _
      $region10: #{harr_iwav_cat.1} parent=5 // pred_check_branch
        %151 = sbr.rel (%p148) target = $region12
      $region11: #{harr_iwav_cat.1} parent=5 // pred_region
        %s152 = ssub.s32 %s13, 1
        // Predicated region
        $region13: #{harr_iwav_cat.1} parent=11 // pred_check
          %p153 = pneg %p86
        $region14: #{harr_iwav_cat.1} parent=11 // pred_check_branch
          %155 = sbr.rel (%p153) target = $region16
        $region15: #{harr_iwav_cat.1} parent=11 // pred_region
          _
        $region16: #{harr_iwav_cat.1} parent=11 // pred_fallthru
          _
      $region12: #{harr_iwav_cat.1} parent=5 // pred_fallthru
        _
      %p156 = scmp.lt.s32.totalorder %s13, 2
      // Predicated region
      $region17: #{harr_iwav_cat.1} parent=5 // pred_check
        %p157 = pneg %p156
      $region18: #{harr_iwav_cat.1} parent=5 // pred_check_branch
        %159 = sbr.rel (%p157) target = $region20
      $region19: #{harr_iwav_cat.1} parent=5 // pred_region
        // Predicated region
        $region21: #{harr_iwav_cat.1} parent=19 // pred_check
          %p160 = pneg %p33
        $region22: #{harr_iwav_cat.1} parent=19 // pred_check_branch
          %162 = sbr.rel (%p160) target = $region24
        $region23: #{harr_iwav_cat.1} parent=19 // pred_region
          %p163 = scmp.lt.s32.totalorder %s13, 1
          %s164 = scalar_select %p163, %s13, 1
          %s165 = smul.addr %s164, 4
          %s166 = smul.addr %s165, 8
          %s167 = scalar_lea.vmem %s0, %s166
        $region24: #{harr_iwav_cat.1} parent=19 // pred_fallthru
          _
        // Predicated region
        $region25: #{harr_iwav_cat.1} parent=19 // pred_check
          %p168 = pneg %p59
        $region26: #{harr_iwav_cat.1} parent=19 // pred_check_branch
          %170 = sbr.rel (%p168) target = $region28
        $region27: #{harr_iwav_cat.1} parent=19 // pred_region
          %s171 = sand.u32 %s49, 1
          %s172 = scalar_lea.sflag [#allocation3], %s171
          %s173 = sand.u32 %s49, 1
          %s174 = smul.addr %s173, 128
          %s175 = scalar_lea.vmem [#allocation2], %s174
          %s177 = ssub.s32 2048, 2048
          %178 = vsyncadd %s172, %s177
          %s179 = smul.addr %s13, 16
          %s180 = smul.addr %s179, 128
          %s181 = scalar_lea.hbm %s1, %s180
          %s182 = sshll.u32 %s175, 4
          %s183 = int_to_ptr.vmem [resolvable:$true] %s182
          %188 = dma.hbm_to_vmem [thread:$0]  %s181, 2048, %s183, %s172, 128, 128, 8
        $region28: #{harr_iwav_cat.1} parent=19 // pred_fallthru
          _
        // Predicated region
        $region29: #{harr_iwav_cat.1} parent=19 // pred_check
          %p189 = pneg %p106
        $region30: #{harr_iwav_cat.1} parent=19 // pred_check_branch
          %191 = sbr.rel (%p189) target = $region32
        $region31: #{harr_iwav_cat.1} parent=19 // pred_region
          %p192 = scmp.lt.s32.totalorder %s13, 1
          %s193 = scalar_select %p192, %s13, 1
          %s194 = smul.addr %s193, 4
          %s195 = smul.addr %s194, 8
          %s196 = scalar_lea.vmem %s3, %s195
        $region32: #{harr_iwav_cat.1} parent=19 // pred_fallthru
          _
      $region20: #{harr_iwav_cat.1} parent=5 // pred_fallthru
        _
      %p197 = scmp.le.s32.totalorder 1, %s13
      %p198 = scmp.lt.s32.totalorder %s13, 3
      %p199 = pnand %p197, %p198
      %p200 = pneg %p199
      // Predicated region
      $region33: #{harr_iwav_cat.1} parent=5 // pred_check
        _
      $region34: #{harr_iwav_cat.1} parent=5 // pred_check_branch
        %202 = sbr.rel (%p199) target = $region36
      $region35: #{harr_iwav_cat.1} parent=5 // pred_region
        %s203 = ssub.s32 %s13, 1
        %s204 = sand.u32 %s52, 1
        %s205 = scalar_lea.sflag [#allocation3], %s204
        %s206 = sand.u32 %s52, 1
        %s207 = smul.addr %s206, 128
        %s208 = scalar_lea.vmem [#allocation2], %s207
        // Predicated region
        $region37: #{harr_iwav_cat.1} parent=35 // pred_check
          %p209 = pneg %p65
        $region38: #{harr_iwav_cat.1} parent=35 // pred_check_branch
          %211 = sbr.rel (%p209) target = $region40
        $region39: #{harr_iwav_cat.1} parent=35 // pred_region
          %212 = dma.done %s205, 2048
        $region40: #{harr_iwav_cat.1} parent=35 // pred_fallthru
          _
        %p213 = scmp.lt.s32.totalorder %s18, 1
        %s214 = scalar_select %p213, %s18, 1
        %s215 = smul.addr %s214, 4
        %s216 = smul.addr %s215, 8
        %s217 = scalar_lea.vmem %s0, %s216
        %p218 = pneg %p39
        %p219 = pneg %p36
        %s220 = sand.u32 %s52, 1
        %s221 = scalar_lea.sflag [#allocation3], %s220
        %s222 = sand.u32 %s52, 1
        %s223 = smul.addr %s222, 128
        %s224 = scalar_lea.vmem [#allocation2], %s223
        %p225 = pneg %p65
        %p226 = pneg %p62
        %p227 = pneg %p86
        %p228 = pneg %p83
        %p229 = scmp.lt.s32.totalorder %s18, 1
        %s230 = scalar_select %p229, %s18, 1
        %s231 = smul.addr %s230, 4
        %s232 = smul.addr %s231, 8
        %s233 = scalar_lea.vmem %s3, %s232
        %p234 = pneg %p112
        %p235 = pneg %p109
        %p236 = pneg %p138
        %p237 = pneg %p135
        %p238 = scmp.lt.s32.totalorder %s18, 1
        %s239 = scalar_select %p238, %s18, 1
        %s240 = smul.addr %s239, 20
        %s241 = smul.addr %s240, 8
        %s242 = scalar_lea.vmem %s4, %s241
        %p243 = scmp.lt.s32.totalorder %s18, 1
        %s244 = scalar_select %p243, %s18, 1
        %s245 = smul.addr %s244, 4
        %s246 = smul.addr %s245, 8
        %s247 = scalar_lea.vmem %s0, %s246
        %p248 = scmp.lt.s32.totalorder %s18, 1
        %s249 = scalar_select %p248, %s18, 1
        %s250 = smul.addr %s249, 4
        %s251 = smul.addr %s250, 8
        %s252 = scalar_lea.vmem %s3, %s251
        %p253 = scmp.lt.s32.totalorder %s18, 1
        %s254 = scalar_select %p253, %s18, 1
        %s255 = smul.addr %s254, 20
        %s256 = smul.addr %s255, 8
        %s257 = scalar_lea.vmem %s4, %s256
        %v258 = vld [vmem:[%s247] sm:$0xff]
        %v259 = vld [vmem:[%s247 + $0x8] sm:$0xff]
        %v260 = vld [vmem:[%s247 + $0x10] sm:$0xff]
        %v261 = vld [vmem:[%s247 + $0x18] sm:$0xff]
        %v262 = vld [vmem:[%s2] sm:$0xff]
        %vm263 = vcmask 64512
        %v265 = vsel %vm263, %v258, 0
        %v268 = vsel %vm263, %v259, 0
        %v271 = vsel %vm263, %v260, 0
        %v274 = vsel %vm263, %v261, 0
        %276 = vmatprep.subr.mxu0 0.0
        %277 = vmatpush1.msra.mxu0 %v262
        %278 = vmatprep.subr.mxu0 0.0
        %279 = vmatpush1.msra.mxu0 0.0
        %280 = vmatprep.subr.mxu0 0.0
        %281 = vmatpush1.msra.mxu0 0.0
        %282 = vmatprep.subr.mxu0 0.0
        %283 = vmatpush1.msra.mxu0 0.0
        %284 = vmatprep.subr.mxu0 0.0
        %285 = vmatpush1.msra.mxu0 0.0
        %286 = vmatprep.subr.mxu0 0.0
        %287 = vmatpush1.msra.mxu0 0.0
        %288 = vmatprep.subr.mxu0 0.0
        %289 = vmatpush1.msra.mxu0 0.0
        %290 = vmatprep.subr.mxu0 0.0
        %291 = vmatpush1.msra.mxu0 0.0
        %292 = vmatprep.subr.mxu0 0.0
        %293 = vmatpush1.msra.mxu0 0.0
        %294 = vmatprep.subr.mxu0 0.0
        %295 = vmatpush1.msra.mxu0 0.0
        %296 = vmatprep.subr.mxu0 0.0
        %297 = vmatpush1.msra.mxu0 0.0
        %298 = vmatprep.subr.mxu0 0.0
        %299 = vmatpush1.msra.mxu0 0.0
        %300 = vmatprep.subr.mxu0 0.0
        %301 = vmatpush1.msra.mxu0 0.0
        %302 = vmatprep.subr.mxu0 0.0
        %303 = vmatpush1.msra.mxu0 0.0
        %304 = vmatprep.subr.mxu0 0.0
        %305 = vmatpush1.msra.mxu0 0.0
        %306 = vmatprep.subr.mxu0 0.0
        %307 = vmatpush1.msra.mxu0 0.0
        %308 = vmatprep.subr.mxu0 0.0
        %309 = vmatpush1.msra.mxu0 0.0
        %310 = vmatprep.subr.mxu0 0.0
        %311 = vmatpush1.msra.mxu0 0.0
        %312 = vmatprep.subr.mxu0 0.0
        %313 = vmatpush1.msra.mxu0 0.0
        %314 = vmatprep.subr.mxu0 0.0
        %315 = vmatpush1.msra.mxu0 0.0
        %316 = vmatprep.subr.mxu0 0.0
        %317 = vmatpush1.msra.mxu0 0.0
        %318 = vmatprep.subr.mxu0 0.0
        %319 = vmatpush1.msra.mxu0 0.0
        %320 = vmatprep.subr.mxu0 0.0
        %321 = vmatpush1.msra.mxu0 0.0
        %322 = vmatprep.subr.mxu0 0.0
        %323 = vmatpush1.msra.mxu0 0.0
        %324 = vmatprep.subr.mxu0 0.0
        %325 = vmatpush1.msra.mxu0 0.0
        %326 = vmatprep.subr.mxu0 0.0
        %327 = vmatpush1.msra.mxu0 0.0
        %328 = vmatprep.subr.mxu0 0.0
        %329 = vmatpush1.msra.mxu0 0.0
        %330 = vmatprep.subr.mxu0 0.0
        %331 = vmatpush1.msra.mxu0 0.0
        %332 = vmatprep.subr.mxu0 0.0
        %333 = vmatpush1.msra.mxu0 0.0
        %334 = vmatprep.subr.mxu0 0.0
        %335 = vmatpush1.msra.mxu0 0.0
        %336 = vmatprep.subr.mxu0 0.0
        %337 = vmatpush1.msra.mxu0 0.0
        %338 = vmatprep.subr.mxu0 0.0
        %339 = vmatpush1.msra.mxu0 0.0
        %340 = vmatprep.mubr.f32.mxu0 0.0
        %341 = vmatmul.mubr.f32.gmra.mrb[0].mxu0 %v265
        %v342 = vpop.f32.mrb[0].mxu0
        %v343 = vadd.f32 0.0, %v342
        %v344 = vpop.f32.mrb[0].mxu0
        %345 = vmatprep.mubr.f32.mxu0 0.0
        %346 = vmatmul.mubr.f32.gmra.mrb[0].mxu0 %v268
        %v347 = vpop.f32.mrb[0].mxu0
        %v348 = vadd.f32 0.0, %v347
        %v349 = vpop.f32.mrb[0].mxu0
        %350 = vmatprep.mubr.f32.mxu0 0.0
        %351 = vmatmul.mubr.f32.gmra.mrb[0].mxu0 %v271
        %v352 = vpop.f32.mrb[0].mxu0
        %v353 = vadd.f32 0.0, %v352
        %v354 = vpop.f32.mrb[0].mxu0
        %355 = vmatprep.mubr.f32.mxu0 0.0
        %356 = vmatmul.mubr.f32.gmra.mrb[0].mxu0 %v274
        %v357 = vpop.f32.mrb[0].mxu0
        %v358 = vadd.f32 0.0, %v357
        %v359 = vpop.f32.mrb[0].mxu0
        %360 = vdwg.mxu0
        %vm361 = vcmask 261120
        %362 = vst.msk [vmem:[%s257] sm:$0xff] %vm361, %v343
        %363 = vst.msk [vmem:[%s257 + $0x8] sm:$0xff] %vm361, %v348
        %364 = vst.msk [vmem:[%s257 + $0x10] sm:$0xff] %vm361, %v353
        %365 = vst.msk [vmem:[%s257 + $0x18] sm:$0xff] %vm361, %v358
        %s366 = scalar_lea.vmem %s208, 32 [#allocation2]
        %v367 = vld [vmem:[%s366] sm:$0xff]
        %v368 = vld [vmem:[%s366 + $0x8] sm:$0xff]
        %v369 = vld [vmem:[%s366 + $0x10] sm:$0xff]
        %v370 = vld [vmem:[%s366 + $0x18] sm:$0xff]
        %s371 = scalar_lea.vmem %s2, 8
        %v372 = vld [vmem:[%s371] sm:$0xff]
        %v374 = vsel %vm263, %v367, 0
        %v377 = vsel %vm263, %v368, 0
        %v380 = vsel %vm263, %v369, 0
        %v383 = vsel %vm263, %v370, 0
        %385 = vmatprep.subr.mxu0 0.0
        %386 = vmatpush1.msra.mxu0 %v372
        %387 = vmatprep.subr.mxu0 0.0
        %388 = vmatpush1.msra.mxu0 0.0
        %389 = vmatprep.subr.mxu0 0.0
        %390 = vmatpush1.msra.mxu0 0.0
        %391 = vmatprep.subr.mxu0 0.0
        %392 = vmatpush1.msra.mxu0 0.0
        %393 = vmatprep.subr.mxu0 0.0
        %394 = vmatpush1.msra.mxu0 0.0
        %395 = vmatprep.subr.mxu0 0.0
        %396 = vmatpush1.msra.mxu0 0.0
        %397 = vmatprep.subr.mxu0 0.0
        %398 = vmatpush1.msra.mxu0 0.0
        %399 = vmatprep.subr.mxu0 0.0
        %400 = vmatpush1.msra.mxu0 0.0
        %401 = vmatprep.subr.mxu0 0.0
        %402 = vmatpush1.msra.mxu0 0.0
        %403 = vmatprep.subr.mxu0 0.0
        %404 = vmatpush1.msra.mxu0 0.0
        %405 = vmatprep.subr.mxu0 0.0
        %406 = vmatpush1.msra.mxu0 0.0
        %407 = vmatprep.subr.mxu0 0.0
        %408 = vmatpush1.msra.mxu0 0.0
        %409 = vmatprep.subr.mxu0 0.0
        %410 = vmatpush1.msra.mxu0 0.0
        %411 = vmatprep.subr.mxu0 0.0
        %412 = vmatpush1.msra.mxu0 0.0
        %413 = vmatprep.subr.mxu0 0.0
        %414 = vmatpush1.msra.mxu0 0.0
        %415 = vmatprep.subr.mxu0 0.0
        %416 = vmatpush1.msra.mxu0 0.0
        %417 = vmatprep.subr.mxu0 0.0
        %418 = vmatpush1.msra.mxu0 0.0
        %419 = vmatprep.subr.mxu0 0.0
        %420 = vmatpush1.msra.mxu0 0.0
        %421 = vmatprep.subr.mxu0 0.0
        %422 = vmatpush1.msra.mxu0 0.0
        %423 = vmatprep.subr.mxu0 0.0
        %424 = vmatpush1.msra.mxu0 0.0
        %425 = vmatprep.subr.mxu0 0.0
        %426 = vmatpush1.msra.mxu0 0.0
        %427 = vmatprep.subr.mxu0 0.0
        %428 = vmatpush1.msra.mxu0 0.0
        %429 = vmatprep.subr.mxu0 0.0
        %430 = vmatpush1.msra.mxu0 0.0
        %431 = vmatprep.subr.mxu0 0.0
        %432 = vmatpush1.msra.mxu0 0.0
        %433 = vmatprep.subr.mxu0 0.0
        %434 = vmatpush1.msra.mxu0 0.0
        %435 = vmatprep.subr.mxu0 0.0
        %436 = vmatpush1.msra.mxu0 0.0
        %437 = vmatprep.subr.mxu0 0.0
        %438 = vmatpush1.msra.mxu0 0.0
        %439 = vmatprep.subr.mxu0 0.0
        %440 = vmatpush1.msra.mxu0 0.0
        %441 = vmatprep.subr.mxu0 0.0
        %442 = vmatpush1.msra.mxu0 0.0
        %443 = vmatprep.subr.mxu0 0.0
        %444 = vmatpush1.msra.mxu0 0.0
        %445 = vmatprep.subr.mxu0 0.0
        %446 = vmatpush1.msra.mxu0 0.0
        %447 = vmatprep.subr.mxu0 0.0
        %448 = vmatpush1.msra.mxu0 0.0
        %449 = vmatprep.mubr.f32.mxu0 0.0
        %450 = vmatmul.mubr.f32.gmra.mrb[0].mxu0 %v374
        %v451 = vpop.f32.mrb[0].mxu0
        %v452 = vadd.f32 0.0, %v451
        %v453 = vpop.f32.mrb[0].mxu0
        %454 = vmatprep.mubr.f32.mxu0 0.0
        %455 = vmatmul.mubr.f32.gmra.mrb[0].mxu0 %v377
        %v456 = vpop.f32.mrb[0].mxu0
        %v457 = vadd.f32 0.0, %v456
        %v458 = vpop.f32.mrb[0].mxu0
        %459 = vmatprep.mubr.f32.mxu0 0.0
        %460 = vmatmul.mubr.f32.gmra.mrb[0].mxu0 %v380
        %v461 = vpop.f32.mrb[0].mxu0
        %v462 = vadd.f32 0.0, %v461
        %v463 = vpop.f32.mrb[0].mxu0
        %464 = vmatprep.mubr.f32.mxu0 0.0
        %465 = vmatmul.mubr.f32.gmra.mrb[0].mxu0 %v383
        %v466 = vpop.f32.mrb[0].mxu0
        %v467 = vadd.f32 0.0, %v466
        %v468 = vpop.f32.mrb[0].mxu0
        %469 = vdwg.mxu0
        %470 = vst.msk [vmem:[%s257 + $0x20] sm:$0xff] %vm361, %v452
        %471 = vst.msk [vmem:[%s257 + $0x28] sm:$0xff] %vm361, %v457
        %472 = vst.msk [vmem:[%s257 + $0x30] sm:$0xff] %vm361, %v462
        %473 = vst.msk [vmem:[%s257 + $0x38] sm:$0xff] %vm361, %v467
        %s474 = scalar_lea.vmem %s208, 64 [#allocation2]
        %v475 = vld [vmem:[%s474] sm:$0xff]
        %v476 = vld [vmem:[%s474 + $0x8] sm:$0xff]
        %v477 = vld [vmem:[%s474 + $0x10] sm:$0xff]
        %v478 = vld [vmem:[%s474 + $0x18] sm:$0xff]
        %s479 = scalar_lea.vmem %s2, 16
        %v480 = vld [vmem:[%s479] sm:$0xff]
        %v482 = vsel %vm263, %v475, 0
        %v485 = vsel %vm263, %v476, 0
        %v488 = vsel %vm263, %v477, 0
        %v491 = vsel %vm263, %v478, 0
        %493 = vmatprep.subr.mxu0 0.0
        %494 = vmatpush1.msra.mxu0 %v480
        %495 = vmatprep.subr.mxu0 0.0
        %496 = vmatpush1.msra.mxu0 0.0
        %497 = vmatprep.subr.mxu0 0.0
        %498 = vmatpush1.msra.mxu0 0.0
        %499 = vmatprep.subr.mxu0 0.0
        %500 = vmatpush1.msra.mxu0 0.0
        %501 = vmatprep.subr.mxu0 0.0
        %502 = vmatpush1.msra.mxu0 0.0
        %503 = vmatprep.subr.mxu0 0.0
        %504 = vmatpush1.msra.mxu0 0.0
        %505 = vmatprep.subr.mxu0 0.0
        %506 = vmatpush1.msra.mxu0 0.0
        %507 = vmatprep.subr.mxu0 0.0
        %508 = vmatpush1.msra.mxu0 0.0
        %509 = vmatprep.subr.mxu0 0.0
        %510 = vmatpush1.msra.mxu0 0.0
        %511 = vmatprep.subr.mxu0 0.0
        %512 = vmatpush1.msra.mxu0 0.0
        %513 = vmatprep.subr.mxu0 0.0
        %514 = vmatpush1.msra.mxu0 0.0
        %515 = vmatprep.subr.mxu0 0.0
        %516 = vmatpush1.msra.mxu0 0.0
        %517 = vmatprep.subr.mxu0 0.0
        %518 = vmatpush1.msra.mxu0 0.0
        %519 = vmatprep.subr.mxu0 0.0
        %520 = vmatpush1.msra.mxu0 0.0
        %521 = vmatprep.subr.mxu0 0.0
        %522 = vmatpush1.msra.mxu0 0.0
        %523 = vmatprep.subr.mxu0 0.0
        %524 = vmatpush1.msra.mxu0 0.0
        %525 = vmatprep.subr.mxu0 0.0
        %526 = vmatpush1.msra.mxu0 0.0
        %527 = vmatprep.subr.mxu0 0.0
        %528 = vmatpush1.msra.mxu0 0.0
        %529 = vmatprep.subr.mxu0 0.0
        %530 = vmatpush1.msra.mxu0 0.0
        %531 = vmatprep.subr.mxu0 0.0
        %532 = vmatpush1.msra.mxu0 0.0
        %533 = vmatprep.subr.mxu0 0.0
        %534 = vmatpush1.msra.mxu0 0.0
        %535 = vmatprep.subr.mxu0 0.0
        %536 = vmatpush1.msra.mxu0 0.0
        %537 = vmatprep.subr.mxu0 0.0
        %538 = vmatpush1.msra.mxu0 0.0
        %539 = vmatprep.subr.mxu0 0.0
        %540 = vmatpush1.msra.mxu0 0.0
        %541 = vmatprep.subr.mxu0 0.0
        %542 = vmatpush1.msra.mxu0 0.0
        %543 = vmatprep.subr.mxu0 0.0
        %544 = vmatpush1.msra.mxu0 0.0
        %545 = vmatprep.subr.mxu0 0.0
        %546 = vmatpush1.msra.mxu0 0.0
        %547 = vmatprep.subr.mxu0 0.0
        %548 = vmatpush1.msra.mxu0 0.0
        %549 = vmatprep.subr.mxu0 0.0
        %550 = vmatpush1.msra.mxu0 0.0
        %551 = vmatprep.subr.mxu0 0.0
        %552 = vmatpush1.msra.mxu0 0.0
        %553 = vmatprep.subr.mxu0 0.0
        %554 = vmatpush1.msra.mxu0 0.0
        %555 = vmatprep.subr.mxu0 0.0
        %556 = vmatpush1.msra.mxu0 0.0
        %557 = vmatprep.mubr.f32.mxu0 0.0
        %558 = vmatmul.mubr.f32.gmra.mrb[0].mxu0 %v482
        %v559 = vpop.f32.mrb[0].mxu0
        %v560 = vadd.f32 0.0, %v559
        %v561 = vpop.f32.mrb[0].mxu0
        %562 = vmatprep.mubr.f32.mxu0 0.0
        %563 = vmatmul.mubr.f32.gmra.mrb[0].mxu0 %v485
        %v564 = vpop.f32.mrb[0].mxu0
        %v565 = vadd.f32 0.0, %v564
        %v566 = vpop.f32.mrb[0].mxu0
        %567 = vmatprep.mubr.f32.mxu0 0.0
        %568 = vmatmul.mubr.f32.gmra.mrb[0].mxu0 %v488
        %v569 = vpop.f32.mrb[0].mxu0
        %v570 = vadd.f32 0.0, %v569
        %v571 = vpop.f32.mrb[0].mxu0
        %572 = vmatprep.mubr.f32.mxu0 0.0
        %573 = vmatmul.mubr.f32.gmra.mrb[0].mxu0 %v491
        %v574 = vpop.f32.mrb[0].mxu0
        %v575 = vadd.f32 0.0, %v574
        %v576 = vpop.f32.mrb[0].mxu0
        %577 = vdwg.mxu0
        %578 = vst.msk [vmem:[%s257 + $0x40] sm:$0xff] %vm361, %v560
        %579 = vst.msk [vmem:[%s257 + $0x48] sm:$0xff] %vm361, %v565
        %580 = vst.msk [vmem:[%s257 + $0x50] sm:$0xff] %vm361, %v570
        %581 = vst.msk [vmem:[%s257 + $0x58] sm:$0xff] %vm361, %v575
        %s582 = scalar_lea.vmem %s208, 96 [#allocation2]
        %v583 = vld [vmem:[%s582] sm:$0xff]
        %v584 = vld [vmem:[%s582 + $0x8] sm:$0xff]
        %v585 = vld [vmem:[%s582 + $0x10] sm:$0xff]
        %v586 = vld [vmem:[%s582 + $0x18] sm:$0xff]
        %s587 = scalar_lea.vmem %s2, 24
        %v588 = vld [vmem:[%s587] sm:$0xff]
        %v590 = vsel %vm263, %v583, 0
        %v593 = vsel %vm263, %v584, 0
        %v596 = vsel %vm263, %v585, 0
        %v599 = vsel %vm263, %v586, 0
        %601 = vmatprep.subr.mxu0 0.0
        %602 = vmatpush1.msra.mxu0 %v588
        %603 = vmatprep.subr.mxu0 0.0
        %604 = vmatpush1.msra.mxu0 0.0
        %605 = vmatprep.subr.mxu0 0.0
        %606 = vmatpush1.msra.mxu0 0.0
        %607 = vmatprep.subr.mxu0 0.0
        %608 = vmatpush1.msra.mxu0 0.0
        %609 = vmatprep.subr.mxu0 0.0
        %610 = vmatpush1.msra.mxu0 0.0
        %611 = vmatprep.subr.mxu0 0.0
        %612 = vmatpush1.msra.mxu0 0.0
        %613 = vmatprep.subr.mxu0 0.0
        %614 = vmatpush1.msra.mxu0 0.0
        %615 = vmatprep.subr.mxu0 0.0
        %616 = vmatpush1.msra.mxu0 0.0
        %617 = vmatprep.subr.mxu0 0.0
        %618 = vmatpush1.msra.mxu0 0.0
        %619 = vmatprep.subr.mxu0 0.0
        %620 = vmatpush1.msra.mxu0 0.0
        %621 = vmatprep.subr.mxu0 0.0
        %622 = vmatpush1.msra.mxu0 0.0
        %623 = vmatprep.subr.mxu0 0.0
        %624 = vmatpush1.msra.mxu0 0.0
        %625 = vmatprep.subr.mxu0 0.0
        %626 = vmatpush1.msra.mxu0 0.0
        %627 = vmatprep.subr.mxu0 0.0
        %628 = vmatpush1.msra.mxu0 0.0
        %629 = vmatprep.subr.mxu0 0.0
        %630 = vmatpush1.msra.mxu0 0.0
        %631 = vmatprep.subr.mxu0 0.0
        %632 = vmatpush1.msra.mxu0 0.0
        %633 = vmatprep.subr.mxu0 0.0
        %634 = vmatpush1.msra.mxu0 0.0
        %635 = vmatprep.subr.mxu0 0.0
        %636 = vmatpush1.msra.mxu0 0.0
        %637 = vmatprep.subr.mxu0 0.0
        %638 = vmatpush1.msra.mxu0 0.0
        %639 = vmatprep.subr.mxu0 0.0
        %640 = vmatpush1.msra.mxu0 0.0
        %641 = vmatprep.subr.mxu0 0.0
        %642 = vmatpush1.msra.mxu0 0.0
        %643 = vmatprep.subr.mxu0 0.0
        %644 = vmatpush1.msra.mxu0 0.0
        %645 = vmatprep.subr.mxu0 0.0
        %646 = vmatpush1.msra.mxu0 0.0
        %647 = vmatprep.subr.mxu0 0.0
        %648 = vmatpush1.msra.mxu0 0.0
        %649 = vmatprep.subr.mxu0 0.0
        %650 = vmatpush1.msra.mxu0 0.0
        %651 = vmatprep.subr.mxu0 0.0
        %652 = vmatpush1.msra.mxu0 0.0
        %653 = vmatprep.subr.mxu0 0.0
        %654 = vmatpush1.msra.mxu0 0.0
        %655 = vmatprep.subr.mxu0 0.0
        %656 = vmatpush1.msra.mxu0 0.0
        %657 = vmatprep.subr.mxu0 0.0
        %658 = vmatpush1.msra.mxu0 0.0
        %659 = vmatprep.subr.mxu0 0.0
        %660 = vmatpush1.msra.mxu0 0.0
        %661 = vmatprep.subr.mxu0 0.0
        %662 = vmatpush1.msra.mxu0 0.0
        %663 = vmatprep.subr.mxu0 0.0
        %664 = vmatpush1.msra.mxu0 0.0
        %665 = vmatprep.mubr.f32.mxu0 0.0
        %666 = vmatmul.mubr.f32.gmra.mrb[0].mxu0 %v590
        %v667 = vpop.f32.mrb[0].mxu0
        %v668 = vadd.f32 0.0, %v667
        %v669 = vpop.f32.mrb[0].mxu0
        %670 = vmatprep.mubr.f32.mxu0 0.0
        %671 = vmatmul.mubr.f32.gmra.mrb[0].mxu0 %v593
        %v672 = vpop.f32.mrb[0].mxu0
        %v673 = vadd.f32 0.0, %v672
        %v674 = vpop.f32.mrb[0].mxu0
        %675 = vmatprep.mubr.f32.mxu0 0.0
        %676 = vmatmul.mubr.f32.gmra.mrb[0].mxu0 %v596
        %v677 = vpop.f32.mrb[0].mxu0
        %v678 = vadd.f32 0.0, %v677
        %v679 = vpop.f32.mrb[0].mxu0
        %680 = vmatprep.mubr.f32.mxu0 0.0
        %681 = vmatmul.mubr.f32.gmra.mrb[0].mxu0 %v599
        %v682 = vpop.f32.mrb[0].mxu0
        %v683 = vadd.f32 0.0, %v682
        %v684 = vpop.f32.mrb[0].mxu0
        %685 = vdwg.mxu0
        %686 = vst.msk [vmem:[%s257 + $0x60] sm:$0xff] %vm361, %v668
        %687 = vst.msk [vmem:[%s257 + $0x68] sm:$0xff] %vm361, %v673
        %688 = vst.msk [vmem:[%s257 + $0x70] sm:$0xff] %vm361, %v678
        %689 = vst.msk [vmem:[%s257 + $0x78] sm:$0xff] %vm361, %v683
        %v690 = vld [vmem:[%s252] sm:$0xff]
        %v691 = vld [vmem:[%s252 + $0x8] sm:$0xff]
        %v692 = vld [vmem:[%s252 + $0x10] sm:$0xff]
        %v693 = vld [vmem:[%s252 + $0x18] sm:$0xff]
        %694 = vst.msk [vmem:[%s257 + $0x80] sm:$0xff] %vm361, %v690
        %695 = vst.msk [vmem:[%s257 + $0x88] sm:$0xff] %vm361, %v691
        %696 = vst.msk [vmem:[%s257 + $0x90] sm:$0xff] %vm361, %v692
        %697 = vst.msk [vmem:[%s257 + $0x98] sm:$0xff] %vm361, %v693
        %p698 = scmp.lt.s32.totalorder %s18, 1
        %s699 = scalar_select %p698, %s18, 1
        %s700 = smul.addr %s699, 20
        %s701 = smul.addr %s700, 8
        %s702 = scalar_lea.vmem %s4, %s701
        // Predicated region
        $region41: #{harr_iwav_cat.1} parent=35 // pred_check
          %p703 = pneg %p135
        $region42: #{harr_iwav_cat.1} parent=35 // pred_check_branch
          %705 = sbr.rel (%p703) target = $region44
        $region43: #{harr_iwav_cat.1} parent=35 // pred_region
          _
        $region44: #{harr_iwav_cat.1} parent=35 // pred_fallthru
          _
      $region36: #{harr_iwav_cat.1} parent=5 // pred_fallthru
        _
      %p706 = scmp.le.s32.totalorder 2, %s13
      // Predicated region
      $region45: #{harr_iwav_cat.1} parent=5 // pred_check
        %p707 = pneg %p706
      $region46: #{harr_iwav_cat.1} parent=5 // pred_check_branch
        %709 = sbr.rel (%p707) target = $region48
      $region47: #{harr_iwav_cat.1} parent=5 // pred_region
        %s710 = ssub.s32 %s13, 2
        // Predicated region
        $region49: #{harr_iwav_cat.1} parent=47 // pred_check
          %p711 = pneg %p141
        $region50: #{harr_iwav_cat.1} parent=47 // pred_check_branch
          %713 = sbr.rel (%p711) target = $region52
        $region51: #{harr_iwav_cat.1} parent=47 // pred_region
          %p714 = scmp.lt.s32.totalorder %s19, 1
          %s715 = scalar_select %p714, %s19, 1
          %s716 = smul.addr %s715, 20
          %s717 = smul.addr %s716, 8
          %s718 = scalar_lea.vmem %s4, %s717
        $region52: #{harr_iwav_cat.1} parent=47 // pred_fallthru
          _
      $region48: #{harr_iwav_cat.1} parent=5 // pred_fallthru
        _
    $region6: #{harr_iwav_cat.1} parent=1 // loop_footer
      %s17 = sadd.s32 1, %s13
    $region7: #{harr_iwav_cat.1} parent=1 // loop_footer_branch
      %12 = sbr.rel target = $region3
    $region8: #{harr_iwav_cat.1} parent=1 // loop_exit
      _
    %719 = vsyncpa [#allocation3], 1
    %s720 = scalar_lea.sflag [#allocation3], 1
    %721 = vsyncpa %s720, 1

</llo_original>
